<compile_context>
chip_gen: v5e
topology: v5e:2x2
jax: 0.10.0
libtpu: 0.0.40
codegen_flags: <defaults>
</compile_context>

<pallas_src>
import jax
import jax.numpy as jnp
from jax.experimental import pallas as pl
from jax.experimental.pallas import tpu as pltpu


def qnetwork_kernel(x_ref, w1_ref, b1_ref, w2_ref, b2_ref, w3_ref, b3_ref, o_ref):
    # One [TB, F_in] batch tile: 3 MXU matmuls (bf16 operands, f32 acc) + bias/ReLU on VPU.
    x = x_ref[...]                                                        # bf16 [TB, F_in]
    h1 = jnp.dot(x, w1_ref[...], preferred_element_type=jnp.float32) + b1_ref[...]
    h1 = jnp.maximum(h1, 0.0).astype(jnp.bfloat16)
    h2 = jnp.dot(h1, w2_ref[...], preferred_element_type=jnp.float32) + b2_ref[...]
    h2 = jnp.maximum(h2, 0.0).astype(jnp.bfloat16)
    out = jnp.dot(h2, w3_ref[...], preferred_element_type=jnp.float32) + b3_ref[...]
    o_ref[...] = out.astype(o_ref.dtype)


def qnetwork_forward(x, params, *, block_b=256):
    """x: [B, F_in] f32 (same layout as PyTorch nn.Linear input). Weights stored [F_in, F_out]."""
    w1, b1, w2, b2, w3, b3 = params
    B, f_in = x.shape
    out_size = w3.shape[1]

    # bf16 operands for the MXU; biases stay f32 (added to the f32 accumulator output).
    x_bf = x.astype(jnp.bfloat16)
    w1b, w2b, w3b = (w.astype(jnp.bfloat16) for w in (w1, w2, w3))

    # Pad the batch to a multiple of the tile so every grid step sees a full (8,128)-legal block.
    nb = pl.cdiv(B, block_b)
    b_pad = nb * block_b
    if b_pad != B:
        x_bf = jnp.pad(x_bf, ((0, b_pad - B), (0, 0)))

    # Constant index_map => weights/biases DMA'd once, VMEM-resident across all batch tiles.
    resident = lambda shape: pl.BlockSpec(shape, lambda i, _s=shape: tuple(0 for _ in _s))

    out = pl.pallas_call(
        qnetwork_kernel,
        out_shape=jax.ShapeDtypeStruct((b_pad, out_size), jnp.float32),
        grid=(nb,),
        in_specs=[
            pl.BlockSpec((block_b, f_in), lambda i: (i, 0)),   # stream x tiles over the batch grid
            resident(w1b.shape), resident(b1.shape),
            resident(w2b.shape), resident(b2.shape),
            resident(w3b.shape), resident(b3.shape),
        ],
        out_specs=pl.BlockSpec((block_b, out_size), lambda i: (i, 0)),
        compiler_params=pltpu.CompilerParams(
            dimension_semantics=("parallel",),   # v7x: shard batch tiles across both TensorCores
        ),
    )(x_bf, w1b, b1, w2b, b2, w3b, b3)
    return out[:B]


def init_linear(key, fan_in, fan_out):
    # PyTorch nn.Linear default init: U(-1/sqrt(fan_in), 1/sqrt(fan_in)) for W and b.
    kw, kb = jax.random.split(key)
    bound = 1.0 / jnp.sqrt(jnp.float32(fan_in))
    # stored as [fan_in, fan_out] (transpose of PyTorch's [out, in]) so kernel does x @ W
    w = jax.random.uniform(kw, (fan_in, fan_out), jnp.float32, -bound, bound)
    b = jax.random.uniform(kb, (1, fan_out), jnp.float32, -bound, bound)
    return w, b


def make_params(key, input_size, output_size, hidden_size=64):
    k1, k2, k3 = jax.random.split(key, 3)
    w1, b1 = init_linear(k1, input_size, hidden_size)
    w2, b2 = init_linear(k2, hidden_size, hidden_size)
    w3, b3 = init_linear(k3, hidden_size, output_size)
    return (w1, b1, w2, b2, w3, b3)


def qnetwork_ref(x, params):
    # Reference mimicking the kernel's numerics: bf16 operands, f32 accumulation.
    w1, b1, w2, b2, w3, b3 = params
    xb = x.astype(jnp.bfloat16)
    w1b, w2b, w3b = (w.astype(jnp.bfloat16) for w in (w1, w2, w3))
    h1 = jnp.maximum(jnp.dot(xb, w1b, preferred_element_type=jnp.float32) + b1, 0.0)
    h2 = jnp.maximum(jnp.dot(h1.astype(jnp.bfloat16), w2b, preferred_element_type=jnp.float32) + b2, 0.0)
    return jnp.dot(h2.astype(jnp.bfloat16), w3b, preferred_element_type=jnp.float32) + b3


if __name__ == "__main__":
    key = jax.random.PRNGKey(0)
    # batch chosen so the kernel exercises both the batch grid (2 tiles of 256) and edge padding.
    batch, input_size, output_size, hidden_size = 260, 16, 4, 64

    kx, kp = jax.random.split(key)
    x = jax.random.normal(kx, (batch, input_size), jnp.float32)
    params = make_params(kp, input_size, output_size, hidden_size)

    out = qnetwork_forward(x, params)
    out = jax.block_until_ready(out)

    ref = qnetwork_ref(x, params)
    assert out.shape == (batch, output_size)
    assert jnp.allclose(out, ref, atol=2e-2, rtol=2e-2), "mismatch vs reference"

    print("KERNEL_OK")
</pallas_src>

<mosaic_0001>
module attributes {stable_mosaic.version = 11 : i64} {
  func.func @qnetwork_kernel(%arg0: i32, %arg1: memref<256x16xbf16, #tpu.memory_space<vmem>>, %arg2: memref<16x64xbf16, #tpu.memory_space<vmem>>, %arg3: memref<1x64xf32, #tpu.memory_space<vmem>>, %arg4: memref<64x64xbf16, #tpu.memory_space<vmem>>, %arg5: memref<1x64xf32, #tpu.memory_space<vmem>>, %arg6: memref<64x4xbf16, #tpu.memory_space<vmem>>, %arg7: memref<1x4xf32, #tpu.memory_space<vmem>>, %arg8: memref<256x4xf32, #tpu.memory_space<vmem>>) attributes {dimension_semantics = [#tpu.dimension_semantics<parallel>], iteration_bounds = array<i64: 2>, scalar_prefetch = 0 : i64, scratch_operands = 0 : i64, tpu.core_type = #tpu.core_type<tc>, window_params = [{transform_indices = @transform_0, window_bounds = array<i64: 256, 16>}, {pipeline_mode = #tpu.pipeline_mode<synchronous>, transform_indices = @transform_1, window_bounds = array<i64: 16, 64>}, {pipeline_mode = #tpu.pipeline_mode<synchronous>, transform_indices = @transform_2, window_bounds = array<i64: 1, 64>}, {pipeline_mode = #tpu.pipeline_mode<synchronous>, transform_indices = @transform_3, window_bounds = array<i64: 64, 64>}, {pipeline_mode = #tpu.pipeline_mode<synchronous>, transform_indices = @transform_4, window_bounds = array<i64: 1, 64>}, {pipeline_mode = #tpu.pipeline_mode<synchronous>, transform_indices = @transform_5, window_bounds = array<i64: 64, 4>}, {pipeline_mode = #tpu.pipeline_mode<synchronous>, transform_indices = @transform_6, window_bounds = array<i64: 1, 4>}, {transform_indices = @transform_7, window_bounds = array<i64: 256, 4>}]} {
    %c0 = arith.constant 0 : index
    %c0_0 = arith.constant 0 : index
    %0 = vector.load %arg1[%c0, %c0_0] : memref<256x16xbf16, #tpu.memory_space<vmem>>, vector<256x16xbf16>
    %c0_1 = arith.constant 0 : index
    %c0_2 = arith.constant 0 : index
    %1 = vector.load %arg2[%c0_1, %c0_2] : memref<16x64xbf16, #tpu.memory_space<vmem>>, vector<16x64xbf16>
    %cst = arith.constant dense<0.000000e+00> : vector<256x64xf32>
    %2 = tpu.matmul %0, %1, %cst {dimension_numbers = #tpu.dot_dimension_numbers<[1], [0], [0], [1], [0, 0, 1, 1], [], []>} : vector<256x16xbf16>, vector<16x64xbf16>, vector<256x64xf32> -> vector<256x64xf32>
    %c0_3 = arith.constant 0 : index
    %c0_4 = arith.constant 0 : index
    %3 = vector.load %arg3[%c0_3, %c0_4] : memref<1x64xf32, #tpu.memory_space<vmem>>, vector<1x64xf32>
    %4 = vector.broadcast %3 : vector<1x64xf32> to vector<256x64xf32>
    %5 = arith.addf %2, %4 : vector<256x64xf32>
    %cst_5 = arith.constant 0.000000e+00 : f32
    %6 = vector.broadcast %cst_5 : f32 to vector<256x64xf32>
    %7 = arith.maximumf %5, %6 : vector<256x64xf32>
    %8 = arith.truncf %7 : vector<256x64xf32> to vector<256x64xbf16>
    %c0_6 = arith.constant 0 : index
    %c0_7 = arith.constant 0 : index
    %9 = vector.load %arg4[%c0_6, %c0_7] : memref<64x64xbf16, #tpu.memory_space<vmem>>, vector<64x64xbf16>
    %cst_8 = arith.constant dense<0.000000e+00> : vector<256x64xf32>
    %10 = tpu.matmul %8, %9, %cst_8 {dimension_numbers = #tpu.dot_dimension_numbers<[1], [0], [0], [1], [0, 0, 1, 1], [], []>} : vector<256x64xbf16>, vector<64x64xbf16>, vector<256x64xf32> -> vector<256x64xf32>
    %c0_9 = arith.constant 0 : index
    %c0_10 = arith.constant 0 : index
    %11 = vector.load %arg5[%c0_9, %c0_10] : memref<1x64xf32, #tpu.memory_space<vmem>>, vector<1x64xf32>
    %12 = vector.broadcast %11 : vector<1x64xf32> to vector<256x64xf32>
    %13 = arith.addf %10, %12 : vector<256x64xf32>
    %cst_11 = arith.constant 0.000000e+00 : f32
    %14 = vector.broadcast %cst_11 : f32 to vector<256x64xf32>
    %15 = arith.maximumf %13, %14 : vector<256x64xf32>
    %16 = arith.truncf %15 : vector<256x64xf32> to vector<256x64xbf16>
    %c0_12 = arith.constant 0 : index
    %c0_13 = arith.constant 0 : index
    %17 = vector.load %arg6[%c0_12, %c0_13] : memref<64x4xbf16, #tpu.memory_space<vmem>>, vector<64x4xbf16>
    %cst_14 = arith.constant dense<0.000000e+00> : vector<256x4xf32>
    %18 = tpu.matmul %16, %17, %cst_14 {dimension_numbers = #tpu.dot_dimension_numbers<[1], [0], [0], [1], [0, 0, 1, 1], [], []>} : vector<256x64xbf16>, vector<64x4xbf16>, vector<256x4xf32> -> vector<256x4xf32>
    %c0_15 = arith.constant 0 : index
    %c0_16 = arith.constant 0 : index
    %19 = vector.load %arg7[%c0_15, %c0_16] : memref<1x4xf32, #tpu.memory_space<vmem>>, vector<1x4xf32>
    %20 = vector.broadcast %19 : vector<1x4xf32> to vector<256x4xf32>
    %21 = arith.addf %18, %20 : vector<256x4xf32>
    %c0_17 = arith.constant 0 : index
    %c0_18 = arith.constant 0 : index
    %22 = vector.load %arg8[%c0_17, %c0_18] : memref<256x4xf32, #tpu.memory_space<vmem>>, vector<256x4xf32>
    tpu.vector_store %arg8[%c0_17, %c0_18], %21 {strides = array<i32>} : memref<256x4xf32, #tpu.memory_space<vmem>>, vector<256x4xf32>,
    return
  }
  func.func @transform_0(%arg0: i32) -> (i32, i32) {
    %c0_i32 = arith.constant 0 : i32
    %c0_i32_0 = arith.constant 0 : i32
    return %arg0, %c0_i32 : i32, i32
  }
  func.func @transform_1(%arg0: i32) -> (i32, i32) {
    %c0_i32 = arith.constant 0 : i32
    %c0_i32_0 = arith.constant 0 : i32
    %c0_i32_1 = arith.constant 0 : i32
    return %c0_i32, %c0_i32_0 : i32, i32
  }
  func.func @transform_2(%arg0: i32) -> (i32, i32) {
    %c0_i32 = arith.constant 0 : i32
    %c0_i32_0 = arith.constant 0 : i32
    %c0_i32_1 = arith.constant 0 : i32
    return %c0_i32, %c0_i32_0 : i32, i32
  }
  func.func @transform_3(%arg0: i32) -> (i32, i32) {
    %c0_i32 = arith.constant 0 : i32
    %c0_i32_0 = arith.constant 0 : i32
    %c0_i32_1 = arith.constant 0 : i32
    return %c0_i32, %c0_i32_0 : i32, i32
  }
  func.func @transform_4(%arg0: i32) -> (i32, i32) {
    %c0_i32 = arith.constant 0 : i32
    %c0_i32_0 = arith.constant 0 : i32
    %c0_i32_1 = arith.constant 0 : i32
    return %c0_i32, %c0_i32_0 : i32, i32
  }
  func.func @transform_5(%arg0: i32) -> (i32, i32) {
    %c0_i32 = arith.constant 0 : i32
    %c0_i32_0 = arith.constant 0 : i32
    %c0_i32_1 = arith.constant 0 : i32
    return %c0_i32, %c0_i32_0 : i32, i32
  }
  func.func @transform_6(%arg0: i32) -> (i32, i32) {
    %c0_i32 = arith.constant 0 : i32
    %c0_i32_0 = arith.constant 0 : i32
    %c0_i32_1 = arith.constant 0 : i32
    return %c0_i32, %c0_i32_0 : i32, i32
  }
  func.func @transform_7(%arg0: i32) -> (i32, i32) {
    %c0_i32 = arith.constant 0 : i32
    %c0_i32_0 = arith.constant 0 : i32
    return %arg0, %c0_i32 : i32, i32
  }
}

</mosaic_0001>

<llo_original>
// kernel: tpu_custom_call.1
$region0: #{tpu_custom_call.1}
  #allocation0 [shape = 'u32[]', space=smem, size = 0x4, offset = 0x4, fixed_abs, tag = 'smem constant byte address 0x4 - core index']
  #allocation1 [shape = 'u32[72,128]{1,0:T(1,128)}', space=vmem, size = 0x9000, scoped, tag = 'internal scratch']
  %s0 = inlined_call_operand.vmem [shape: bf16[512,16], index: 0, kind: input, shape index: {}]
  %s1 = inlined_call_operand.vmem [shape: bf16[16,64], index: 1, kind: input, shape index: {}]
  %s2 = inlined_call_operand.vmem [shape: f32[1,64], index: 2, kind: input, shape index: {}]
  %s3 = inlined_call_operand.vmem [shape: bf16[64,64], index: 3, kind: input, shape index: {}]
  %s4 = inlined_call_operand.vmem [shape: f32[1,64], index: 4, kind: input, shape index: {}]
  %s5 = inlined_call_operand.vmem [shape: bf16[64,4], index: 5, kind: input, shape index: {}]
  %s6 = inlined_call_operand.vmem [shape: f32[1,4], index: 6, kind: input, shape index: {}]
  %s7 = inlined_call_operand.vmem [shape: f32[512,4], index: 7, kind: output, shape index: {}]
  %s8 = sld [smem:[#allocation0]]
  $region61: #{tpu_custom_call.1} parent=0
    _
  %s10 = ssub.s32 1, %s8
  %s11 = scalar_select 0, %s10, %s8
  loop: start=0, step=1, limit=4
  $region2: #{tpu_custom_call.1} parent=0 // loop_pre_header
    _
  $region3: #{tpu_custom_call.1} parent=0 // loop_header
    %s13 = sphi 0, %s17
    %p14 = scmp.ge.s32.totalorder %s13, 4
    %s23 = sphi 0, %s25
    %s26 = sphi 0, %s23
    %s27 = sphi 0, %s26
    %s43 = sphi 0, %s27
    %s47 = sphi 0, %s47
    %s49 = sphi 0, %s47
    %s50 = sphi 0, %s49
    %s64 = sphi 0, %s50
    %s68 = sphi 0, %s68
    %s70 = sphi 0, %s68
    %s71 = sphi 0, %s70
    %s85 = sphi 0, %s71
    %s89 = sphi 0, %s89
    %s91 = sphi 0, %s89
    %s92 = sphi 0, %s91
    %s106 = sphi 0, %s92
    %s110 = sphi 0, %s110
    %s112 = sphi 0, %s110
    %s113 = sphi 0, %s112
    %s127 = sphi 0, %s113
    %s131 = sphi 0, %s131
    %s133 = sphi 0, %s131
    %s134 = sphi 0, %s133
    %s148 = sphi 0, %s134
    %s152 = sphi 0, %s152
    %s154 = sphi 0, %s152
    %s155 = sphi 0, %s154
    %s169 = sphi 0, %s155
    %s175 = sphi 0, %s177
    %s178 = sphi 0, %s175
    %s179 = sphi 0, %s178
    %s195 = sphi 0, %s179
  $region4: #{tpu_custom_call.1} parent=0 // loop_header_branch
    %16 = sbr.rel (%p14) target = $region8
  $region5: #{tpu_custom_call.1} parent=0 // loop_body
    %s18 = ssub.s32 %s13, 1
    %s19 = ssub.s32 %s13, 2
    %s20 = sadd.s32 %s13, 1
    %s21 = ssub.s32 %s13, %s20
    %p22 = scmp.eq.s32.totalorder %s21, 0
    %s24 = sadd.s32 %s23, 1
    %s25 = scalar_select %p22, %s23, %s24
    %p28 = pneg %p22
    %p29 = scmp.eq.s32.totalorder %s13, 1
    %p30 = por %p28, %p29
    %p31 = scmp.ne.s32.totalorder %s23, %s26
    %p32 = scmp.eq.s32.totalorder %s13, 0
    %p33 = por %p31, %p32
    %p34 = scmp.ne.s32.totalorder %s23, %s26
    %p35 = scmp.eq.s32.totalorder %s18, 1
    %p36 = por %p34, %p35
    %p37 = scmp.ne.s32.totalorder %s26, %s27
    %p38 = scmp.eq.s32.totalorder %s18, 0
    %p39 = por %p37, %p38
    %p40 = scmp.ne.s32.totalorder %s26, %s27
    %p41 = scmp.eq.s32.totalorder %s19, 1
    %p42 = por %p40, %p41
    %p44 = scmp.ne.s32.totalorder %s27, %s43
    %p45 = scmp.eq.s32.totalorder %s19, 0
    %p46 = por %p44, %p45
    %s48 = sadd.s32 %s47, 1
    %p51 = scmp.eq.s32.totalorder %s13, 1
    %p52 = scmp.ne.s32.totalorder %s47, %s49
    %p53 = scmp.eq.s32.totalorder %s13, 0
    %p54 = por %p52, %p53
    %p55 = scmp.ne.s32.totalorder %s47, %s49
    %p56 = scmp.eq.s32.totalorder %s18, 1
    %p57 = por %p55, %p56
    %p58 = scmp.ne.s32.totalorder %s49, %s50
    %p59 = scmp.eq.s32.totalorder %s18, 0
    %p60 = por %p58, %p59
    %p61 = scmp.ne.s32.totalorder %s49, %s50
    %p62 = scmp.eq.s32.totalorder %s19, 1
    %p63 = por %p61, %p62
    %p65 = scmp.ne.s32.totalorder %s50, %s64
    %p66 = scmp.eq.s32.totalorder %s19, 0
    %p67 = por %p65, %p66
    %s69 = sadd.s32 %s68, 1
    %p72 = scmp.eq.s32.totalorder %s13, 1
    %p73 = scmp.ne.s32.totalorder %s68, %s70
    %p74 = scmp.eq.s32.totalorder %s13, 0
    %p75 = por %p73, %p74
    %p76 = scmp.ne.s32.totalorder %s68, %s70
    %p77 = scmp.eq.s32.totalorder %s18, 1
    %p78 = por %p76, %p77
    %p79 = scmp.ne.s32.totalorder %s70, %s71
    %p80 = scmp.eq.s32.totalorder %s18, 0
    %p81 = por %p79, %p80
    %p82 = scmp.ne.s32.totalorder %s70, %s71
    %p83 = scmp.eq.s32.totalorder %s19, 1
    %p84 = por %p82, %p83
    %p86 = scmp.ne.s32.totalorder %s71, %s85
    %p87 = scmp.eq.s32.totalorder %s19, 0
    %p88 = por %p86, %p87
    %s90 = sadd.s32 %s89, 1
    %p93 = scmp.eq.s32.totalorder %s13, 1
    %p94 = scmp.ne.s32.totalorder %s89, %s91
    %p95 = scmp.eq.s32.totalorder %s13, 0
    %p96 = por %p94, %p95
    %p97 = scmp.ne.s32.totalorder %s89, %s91
    %p98 = scmp.eq.s32.totalorder %s18, 1
    %p99 = por %p97, %p98
    %p100 = scmp.ne.s32.totalorder %s91, %s92
    %p101 = scmp.eq.s32.totalorder %s18, 0
    %p102 = por %p100, %p101
    %p103 = scmp.ne.s32.totalorder %s91, %s92
    %p104 = scmp.eq.s32.totalorder %s19, 1
    %p105 = por %p103, %p104
    %p107 = scmp.ne.s32.totalorder %s92, %s106
    %p108 = scmp.eq.s32.totalorder %s19, 0
    %p109 = por %p107, %p108
    %s111 = sadd.s32 %s110, 1
    %p114 = scmp.eq.s32.totalorder %s13, 1
    %p115 = scmp.ne.s32.totalorder %s110, %s112
    %p116 = scmp.eq.s32.totalorder %s13, 0
    %p117 = por %p115, %p116
    %p118 = scmp.ne.s32.totalorder %s110, %s112
    %p119 = scmp.eq.s32.totalorder %s18, 1
    %p120 = por %p118, %p119
    %p121 = scmp.ne.s32.totalorder %s112, %s113
    %p122 = scmp.eq.s32.totalorder %s18, 0
    %p123 = por %p121, %p122
    %p124 = scmp.ne.s32.totalorder %s112, %s113
    %p125 = scmp.eq.s32.totalorder %s19, 1
    %p126 = por %p124, %p125
    %p128 = scmp.ne.s32.totalorder %s113, %s127
    %p129 = scmp.eq.s32.totalorder %s19, 0
    %p130 = por %p128, %p129
    %s132 = sadd.s32 %s131, 1
    %p135 = scmp.eq.s32.totalorder %s13, 1
    %p136 = scmp.ne.s32.totalorder %s131, %s133
    %p137 = scmp.eq.s32.totalorder %s13, 0
    %p138 = por %p136, %p137
    %p139 = scmp.ne.s32.totalorder %s131, %s133
    %p140 = scmp.eq.s32.totalorder %s18, 1
    %p141 = por %p139, %p140
    %p142 = scmp.ne.s32.totalorder %s133, %s134
    %p143 = scmp.eq.s32.totalorder %s18, 0
    %p144 = por %p142, %p143
    %p145 = scmp.ne.s32.totalorder %s133, %s134
    %p146 = scmp.eq.s32.totalorder %s19, 1
    %p147 = por %p145, %p146
    %p149 = scmp.ne.s32.totalorder %s134, %s148
    %p150 = scmp.eq.s32.totalorder %s19, 0
    %p151 = por %p149, %p150
    %s153 = sadd.s32 %s152, 1
    %p156 = scmp.eq.s32.totalorder %s13, 1
    %p157 = scmp.ne.s32.totalorder %s152, %s154
    %p158 = scmp.eq.s32.totalorder %s13, 0
    %p159 = por %p157, %p158
    %p160 = scmp.ne.s32.totalorder %s152, %s154
    %p161 = scmp.eq.s32.totalorder %s18, 1
    %p162 = por %p160, %p161
    %p163 = scmp.ne.s32.totalorder %s154, %s155
    %p164 = scmp.eq.s32.totalorder %s18, 0
    %p165 = por %p163, %p164
    %p166 = scmp.ne.s32.totalorder %s154, %s155
    %p167 = scmp.eq.s32.totalorder %s19, 1
    %p168 = por %p166, %p167
    %p170 = scmp.ne.s32.totalorder %s155, %s169
    %p171 = scmp.eq.s32.totalorder %s19, 0
    %p172 = por %p170, %p171
    %s173 = ssub.s32 %s13, %s20
    %p174 = scmp.eq.s32.totalorder %s173, 0
    %s176 = sadd.s32 %s175, 1
    %s177 = scalar_select %p174, %s175, %s176
    %p180 = pneg %p174
    %p181 = scmp.eq.s32.totalorder %s13, 1
    %p182 = por %p180, %p181
    %p183 = scmp.ne.s32.totalorder %s175, %s178
    %p184 = scmp.eq.s32.totalorder %s13, 0
    %p185 = por %p183, %p184
    %p186 = scmp.ne.s32.totalorder %s175, %s178
    %p187 = scmp.eq.s32.totalorder %s18, 1
    %p188 = por %p186, %p187
    %p189 = scmp.ne.s32.totalorder %s178, %s179
    %p190 = scmp.eq.s32.totalorder %s18, 0
    %p191 = por %p189, %p190
    %p192 = scmp.ne.s32.totalorder %s178, %s179
    %p193 = scmp.eq.s32.totalorder %s19, 1
    %p194 = por %p192, %p193
    %p196 = scmp.ne.s32.totalorder %s179, %s195
    %p197 = scmp.eq.s32.totalorder %s19, 0
    %p198 = por %p196, %p197
    %p199 = scmp.le.s32.totalorder 1, %s13
    %p200 = scmp.lt.s32.totalorder %s13, 3
    %p201 = pnand %p199, %p200
    %p202 = pneg %p201
    // Predicated region
    $region9: #{tpu_custom_call.1} parent=5 // pred_check
      _
    $region10: #{tpu_custom_call.1} parent=5 // pred_check_branch
      %204 = sbr.rel (%p201) target = $region12
    $region11: #{tpu_custom_call.1} parent=5 // pred_region
      %s205 = ssub.s32 %s13, 1
      // Predicated region
      $region13: #{tpu_custom_call.1} parent=11 // pred_check
        %p206 = pneg %p60
      $region14: #{tpu_custom_call.1} parent=11 // pred_check_branch
        %208 = sbr.rel (%p206) target = $region16
      $region15: #{tpu_custom_call.1} parent=11 // pred_region
        _
      $region16: #{tpu_custom_call.1} parent=11 // pred_fallthru
        _
      // Predicated region
      $region17: #{tpu_custom_call.1} parent=11 // pred_check
        %p209 = pneg %p81
      $region18: #{tpu_custom_call.1} parent=11 // pred_check_branch
        %211 = sbr.rel (%p209) target = $region20
      $region19: #{tpu_custom_call.1} parent=11 // pred_region
        _
      $region20: #{tpu_custom_call.1} parent=11 // pred_fallthru
        _
      // Predicated region
      $region21: #{tpu_custom_call.1} parent=11 // pred_check
        %p212 = pneg %p102
      $region22: #{tpu_custom_call.1} parent=11 // pred_check_branch
        %214 = sbr.rel (%p212) target = $region24
      $region23: #{tpu_custom_call.1} parent=11 // pred_region
        _
      $region24: #{tpu_custom_call.1} parent=11 // pred_fallthru
        _
      // Predicated region
      $region25: #{tpu_custom_call.1} parent=11 // pred_check
        %p215 = pneg %p123
      $region26: #{tpu_custom_call.1} parent=11 // pred_check_branch
        %217 = sbr.rel (%p215) target = $region28
      $region27: #{tpu_custom_call.1} parent=11 // pred_region
        _
      $region28: #{tpu_custom_call.1} parent=11 // pred_fallthru
        _
      // Predicated region
      $region29: #{tpu_custom_call.1} parent=11 // pred_check
        %p218 = pneg %p144
      $region30: #{tpu_custom_call.1} parent=11 // pred_check_branch
        %220 = sbr.rel (%p218) target = $region32
      $region31: #{tpu_custom_call.1} parent=11 // pred_region
        _
      $region32: #{tpu_custom_call.1} parent=11 // pred_fallthru
        _
      // Predicated region
      $region33: #{tpu_custom_call.1} parent=11 // pred_check
        %p221 = pneg %p165
      $region34: #{tpu_custom_call.1} parent=11 // pred_check_branch
        %223 = sbr.rel (%p221) target = $region36
      $region35: #{tpu_custom_call.1} parent=11 // pred_region
        _
      $region36: #{tpu_custom_call.1} parent=11 // pred_fallthru
        _
    $region12: #{tpu_custom_call.1} parent=5 // pred_fallthru
      _
    %p224 = scmp.lt.s32.totalorder %s13, 2
    // Predicated region
    $region37: #{tpu_custom_call.1} parent=5 // pred_check
      %p225 = pneg %p224
    $region38: #{tpu_custom_call.1} parent=5 // pred_check_branch
      %227 = sbr.rel (%p225) target = $region40
    $region39: #{tpu_custom_call.1} parent=5 // pred_region
      // Predicated region
      $region41: #{tpu_custom_call.1} parent=39 // pred_check
        %p228 = pneg %p33
      $region42: #{tpu_custom_call.1} parent=39 // pred_check_branch
        %230 = sbr.rel (%p228) target = $region44
      $region43: #{tpu_custom_call.1} parent=39 // pred_region
        %s231 = smul.u32 32, %s13
        %p232 = scmp.lt.s32.totalorder %s231, 63
        %s233 = scalar_select %p232, %s231, 63
        %s234 = smul.addr %s233, 4
        %s235 = scalar_lea.vmem %s0, %s234
        %s236 = smul.u32 32, %s13
      $region44: #{tpu_custom_call.1} parent=39 // pred_fallthru
        _
    $region40: #{tpu_custom_call.1} parent=5 // pred_fallthru
      _
    %p237 = scmp.le.s32.totalorder 1, %s13
    %p238 = scmp.lt.s32.totalorder %s13, 3
    %p239 = pnand %p237, %p238
    %p240 = pneg %p239
    // Predicated region
    $region45: #{tpu_custom_call.1} parent=5 // pred_check
      _
    $region46: #{tpu_custom_call.1} parent=5 // pred_check_branch
      %242 = sbr.rel (%p239) target = $region48
    $region47: #{tpu_custom_call.1} parent=5 // pred_region
      %s243 = ssub.s32 %s13, 1
      %s244 = smul.u32 32, %s18
      %p245 = scmp.lt.s32.totalorder %s244, 63
      %s246 = scalar_select %p245, %s244, 63
      %s247 = smul.addr %s246, 4
      %s248 = scalar_lea.vmem %s0, %s247
      %p249 = pneg %p39
      %p250 = pneg %p36
      %p251 = pneg %p60
      %p252 = pneg %p57
      %p253 = pneg %p81
      %p254 = pneg %p78
      %p255 = pneg %p102
      %p256 = pneg %p99
      %p257 = pneg %p123
      %p258 = pneg %p120
      %p259 = pneg %p144
      %p260 = pneg %p141
      %p261 = pneg %p165
      %p262 = pneg %p162
      %p263 = pneg %p191
      %p264 = pneg %p188
      %s265 = smul.u32 32, %s18
      %p266 = scmp.lt.s32.totalorder %s265, 63
      %s267 = scalar_select %p266, %s265, 63
      %s268 = smul.addr %s267, 8
      %s269 = scalar_lea.vmem %s7, %s268
      %s270 = smul.u32 32, %s18
      %p271 = scmp.lt.s32.totalorder %s270, 63
      %s272 = scalar_select %p271, %s270, 63
      %s273 = smul.addr %s272, 4
      %s274 = scalar_lea.vmem %s0, %s273
      %s275 = smul.u32 32, %s18
      %s276 = smul.u32 32, %s18
      %p277 = scmp.lt.s32.totalorder %s276, 63
      %s278 = scalar_select %p277, %s276, 63
      %s279 = smul.addr %s278, 8
      %s280 = scalar_lea.vmem %s7, %s279
      %s281 = smul.u32 32, %s18
      %v283 = vld [vmem:[%s274] sm:$0xf]
      %v284 = vld [vmem:[%s274 + $0x4] sm:$0xf]
      %v285 = vld [vmem:[%s274 + $0x8] sm:$0xf]
      %v286 = vld [vmem:[%s274 + $0xc] sm:$0xf]
      %v287 = vld [vmem:[%s274 + $0x10] sm:$0xf]
      %v288 = vld [vmem:[%s274 + $0x14] sm:$0xf]
      %v289 = vld [vmem:[%s274 + $0x18] sm:$0xf]
      %v290 = vld [vmem:[%s274 + $0x1c] sm:$0xf]
      %v291 = vld [vmem:[%s274 + $0x20] sm:$0xf]
      %v292 = vld [vmem:[%s274 + $0x24] sm:$0xf]
      %v293 = vld [vmem:[%s274 + $0x28] sm:$0xf]
      %v294 = vld [vmem:[%s274 + $0x2c] sm:$0xf]
      %v295 = vld [vmem:[%s274 + $0x30] sm:$0xf]
      %v296 = vld [vmem:[%s274 + $0x34] sm:$0xf]
      %v297 = vld [vmem:[%s274 + $0x38] sm:$0xf]
      %v298 = vld [vmem:[%s274 + $0x3c] sm:$0xf]
      %v299 = vld [vmem:[%s274 + $0x40] sm:$0xf]
      %v300 = vld [vmem:[%s274 + $0x44] sm:$0xf]
      %v301 = vld [vmem:[%s274 + $0x48] sm:$0xf]
      %v302 = vld [vmem:[%s274 + $0x4c] sm:$0xf]
      %v303 = vld [vmem:[%s274 + $0x50] sm:$0xf]
      %v304 = vld [vmem:[%s274 + $0x54] sm:$0xf]
      %v305 = vld [vmem:[%s274 + $0x58] sm:$0xf]
      %v306 = vld [vmem:[%s274 + $0x5c] sm:$0xf]
      %v307 = vld [vmem:[%s274 + $0x60] sm:$0xf]
      %v308 = vld [vmem:[%s274 + $0x64] sm:$0xf]
      %v309 = vld [vmem:[%s274 + $0x68] sm:$0xf]
      %v310 = vld [vmem:[%s274 + $0x6c] sm:$0xf]
      %v311 = vld [vmem:[%s274 + $0x70] sm:$0xf]
      %v312 = vld [vmem:[%s274 + $0x74] sm:$0xf]
      %v313 = vld [vmem:[%s274 + $0x78] sm:$0xf]
      %v314 = vld [vmem:[%s274 + $0x7c] sm:$0xf]
      %v315 = vld [vmem:[%s1] sm:$0xf]
      %v316 = vld [vmem:[%s1 + $0x4] sm:$0xf]
      %v317 = vld [vmem:[%s2] sm:$0x1]
      %v319 = vperm.slane %v317, 0
      %v353 = vunpack.c.l.b16 %v283
      %v354 = vunpack.c.l.b16 %v284
      %v355 = vunpack.c.l.b16 %v285
      %v356 = vunpack.c.l.b16 %v286
      %v357 = vunpack.c.l.b16 %v287
      %v358 = vunpack.c.l.b16 %v288
      %v359 = vunpack.c.l.b16 %v289
      %v360 = vunpack.c.l.b16 %v290
      %v361 = vunpack.c.l.b16 %v291
      %v362 = vunpack.c.l.b16 %v292
      %v363 = vunpack.c.l.b16 %v293
      %v364 = vunpack.c.l.b16 %v294
      %v365 = vunpack.c.l.b16 %v295
      %v366 = vunpack.c.l.b16 %v296
      %v367 = vunpack.c.l.b16 %v297
      %v368 = vunpack.c.l.b16 %v298
      %v369 = vunpack.c.l.b16 %v299
      %v370 = vunpack.c.l.b16 %v300
      %v371 = vunpack.c.l.b16 %v301
      %v372 = vunpack.c.l.b16 %v302
      %v373 = vunpack.c.l.b16 %v303
      %v374 = vunpack.c.l.b16 %v304
      %v375 = vunpack.c.l.b16 %v305
      %v376 = vunpack.c.l.b16 %v306
      %v377 = vunpack.c.l.b16 %v307
      %v378 = vunpack.c.l.b16 %v308
      %v379 = vunpack.c.l.b16 %v309
      %v380 = vunpack.c.l.b16 %v310
      %v381 = vunpack.c.l.b16 %v311
      %v382 = vunpack.c.l.b16 %v312
      %v383 = vunpack.c.l.b16 %v313
      %v384 = vunpack.c.l.b16 %v314
      %v385 = vpack.c.b16 %v354, %v353
      %v386 = vpack.c.b16 %v356, %v355
      %v387 = vpack.c.b16 %v358, %v357
      %v388 = vpack.c.b16 %v360, %v359
      %v389 = vpack.c.b16 %v362, %v361
      %v390 = vpack.c.b16 %v364, %v363
      %v391 = vpack.c.b16 %v366, %v365
      %v392 = vpack.c.b16 %v368, %v367
      %v393 = vpack.c.b16 %v370, %v369
      %v394 = vpack.c.b16 %v372, %v371
      %v395 = vpack.c.b16 %v374, %v373
      %v396 = vpack.c.b16 %v376, %v375
      %v397 = vpack.c.b16 %v378, %v377
      %v398 = vpack.c.b16 %v380, %v379
      %v399 = vpack.c.b16 %v382, %v381
      %v400 = vpack.c.b16 %v384, %v383
      %v403 = vunpack.c.l.b16 %v315
      %v404 = vunpack.c.l.b16 %v316
      %v405 = vpack.c.b16 %v404, %v403
      %vm407 = vcmask 130048
      %v409 = vsel %vm407, %v385, 0
      %v412 = vsel %vm407, %v386, 0
      %v415 = vsel %vm407, %v387, 0
      %v418 = vsel %vm407, %v388, 0
      %v421 = vsel %vm407, %v389, 0
      %v424 = vsel %vm407, %v390, 0
      %v427 = vsel %vm407, %v391, 0
      %v430 = vsel %vm407, %v392, 0
      %v433 = vsel %vm407, %v393, 0
      %v436 = vsel %vm407, %v394, 0
      %v439 = vsel %vm407, %v395, 0
      %v442 = vsel %vm407, %v396, 0
      %v445 = vsel %vm407, %v397, 0
      %v448 = vsel %vm407, %v398, 0
      %v451 = vsel %vm407, %v399, 0
      %v454 = vsel %vm407, %v400, 0
      %456 = vmatpush.bf16.msra.mxu0 0
      %457 = vmatpush.bf16.msra.mxu0 0
      %458 = vmatpush.bf16.msra.mxu0 0
      %459 = vmatpush.bf16.msra.mxu0 0
      %460 = vmatpush.bf16.msra.mxu0 0
      %461 = vmatpush.bf16.msra.mxu0 0
      %462 = vmatpush.bf16.msra.mxu0 0
      %463 = vmatpush.bf16.msra.mxu0 %v405
      %464 = vmatmul.bf16.gmra.mxu0 %v409
      %v465 = vpop.f32.mrf.mxu0
      %v466 = vadd.f32 %v319, %v465
      %v467 = vpop.f32.mrf.mxu0
      %v468 = vadd.f32 %v319, %v467
      %469 = vmatmul.bf16.gmra.mxu0 %v412
      %v470 = vpop.f32.mrf.mxu0
      %v471 = vadd.f32 %v319, %v470
      %v472 = vpop.f32.mrf.mxu0
      %v473 = vadd.f32 %v319, %v472
      %474 = vmatmul.bf16.gmra.mxu0 %v415
      %v475 = vpop.f32.mrf.mxu0
      %v476 = vadd.f32 %v319, %v475
      %v477 = vpop.f32.mrf.mxu0
      %v478 = vadd.f32 %v319, %v477
      %479 = vmatmul.bf16.gmra.mxu0 %v418
      %v480 = vpop.f32.mrf.mxu0
      %v481 = vadd.f32 %v319, %v480
      %v482 = vpop.f32.mrf.mxu0
      %v483 = vadd.f32 %v319, %v482
      %484 = vmatmul.bf16.gmra.mxu0 %v421
      %v485 = vpop.f32.mrf.mxu0
      %v486 = vadd.f32 %v319, %v485
      %v487 = vpop.f32.mrf.mxu0
      %v488 = vadd.f32 %v319, %v487
      %489 = vmatmul.bf16.gmra.mxu0 %v424
      %v490 = vpop.f32.mrf.mxu0
      %v491 = vadd.f32 %v319, %v490
      %v492 = vpop.f32.mrf.mxu0
      %v493 = vadd.f32 %v319, %v492
      %494 = vmatmul.bf16.gmra.mxu0 %v427
      %v495 = vpop.f32.mrf.mxu0
      %v496 = vadd.f32 %v319, %v495
      %v497 = vpop.f32.mrf.mxu0
      %v498 = vadd.f32 %v319, %v497
      %499 = vmatmul.bf16.gmra.mxu0 %v430
      %v500 = vpop.f32.mrf.mxu0
      %v501 = vadd.f32 %v319, %v500
      %v502 = vpop.f32.mrf.mxu0
      %v503 = vadd.f32 %v319, %v502
      %504 = vmatmul.bf16.gmra.mxu0 %v433
      %v505 = vpop.f32.mrf.mxu0
      %v506 = vadd.f32 %v319, %v505
      %v507 = vpop.f32.mrf.mxu0
      %v508 = vadd.f32 %v319, %v507
      %509 = vmatmul.bf16.gmra.mxu0 %v436
      %v510 = vpop.f32.mrf.mxu0
      %v511 = vadd.f32 %v319, %v510
      %v512 = vpop.f32.mrf.mxu0
      %v513 = vadd.f32 %v319, %v512
      %514 = vmatmul.bf16.gmra.mxu0 %v439
      %v515 = vpop.f32.mrf.mxu0
      %v516 = vadd.f32 %v319, %v515
      %v517 = vpop.f32.mrf.mxu0
      %v518 = vadd.f32 %v319, %v517
      %519 = vmatmul.bf16.gmra.mxu0 %v442
      %v520 = vpop.f32.mrf.mxu0
      %v521 = vadd.f32 %v319, %v520
      %v522 = vpop.f32.mrf.mxu0
      %v523 = vadd.f32 %v319, %v522
      %524 = vmatmul.bf16.gmra.mxu0 %v445
      %v525 = vpop.f32.mrf.mxu0
      %v526 = vadd.f32 %v319, %v525
      %v527 = vpop.f32.mrf.mxu0
      %v528 = vadd.f32 %v319, %v527
      %529 = vmatmul.bf16.gmra.mxu0 %v448
      %v530 = vpop.f32.mrf.mxu0
      %v531 = vadd.f32 %v319, %v530
      %v532 = vpop.f32.mrf.mxu0
      %v533 = vadd.f32 %v319, %v532
      %534 = vmatmul.bf16.gmra.mxu0 %v451
      %v535 = vpop.f32.mrf.mxu0
      %v536 = vadd.f32 %v319, %v535
      %v537 = vpop.f32.mrf.mxu0
      %v538 = vadd.f32 %v319, %v537
      %539 = vmatmul.bf16.gmra.mxu0 %v454
      %v540 = vpop.f32.mrf.mxu0
      %v541 = vadd.f32 %v319, %v540
      %v542 = vpop.f32.mrf.mxu0
      %v543 = vadd.f32 %v319, %v542
      %544 = vdwg.mxu0
      %v545 = vmax.f32 %v466, 0.0
      %v546 = vmax.f32 %v468, 0.0
      %v547 = vmax.f32 %v471, 0.0
      %v548 = vmax.f32 %v473, 0.0
      %v549 = vmax.f32 %v476, 0.0
      %v550 = vmax.f32 %v478, 0.0
      %v551 = vmax.f32 %v481, 0.0
      %v552 = vmax.f32 %v483, 0.0
      %v553 = vmax.f32 %v486, 0.0
      %v554 = vmax.f32 %v488, 0.0
      %v555 = vmax.f32 %v491, 0.0
      %v556 = vmax.f32 %v493, 0.0
      %v557 = vmax.f32 %v496, 0.0
      %v558 = vmax.f32 %v498, 0.0
      %v559 = vmax.f32 %v501, 0.0
      %v560 = vmax.f32 %v503, 0.0
      %v561 = vmax.f32 %v506, 0.0
      %v562 = vmax.f32 %v508, 0.0
      %v563 = vmax.f32 %v511, 0.0
      %v564 = vmax.f32 %v513, 0.0
      %v565 = vmax.f32 %v516, 0.0
      %v566 = vmax.f32 %v518, 0.0
      %v567 = vmax.f32 %v521, 0.0
      %v568 = vmax.f32 %v523, 0.0
      %v569 = vmax.f32 %v526, 0.0
      %v570 = vmax.f32 %v528, 0.0
      %v571 = vmax.f32 %v531, 0.0
      %v572 = vmax.f32 %v533, 0.0
      %v573 = vmax.f32 %v536, 0.0
      %v574 = vmax.f32 %v538, 0.0
      %v575 = vmax.f32 %v541, 0.0
      %v576 = vmax.f32 %v543, 0.0
      %v577 = vpack.c.bf16 %v546, %v545
      %v578 = vpack.c.bf16 %v548, %v547
      %v579 = vpack.c.bf16 %v550, %v549
      %v580 = vpack.c.bf16 %v552, %v551
      %v581 = vpack.c.bf16 %v554, %v553
      %v582 = vpack.c.bf16 %v556, %v555
      %v583 = vpack.c.bf16 %v558, %v557
      %v584 = vpack.c.bf16 %v560, %v559
      %v585 = vpack.c.bf16 %v562, %v561
      %v586 = vpack.c.bf16 %v564, %v563
      %v587 = vpack.c.bf16 %v566, %v565
      %v588 = vpack.c.bf16 %v568, %v567
      %v589 = vpack.c.bf16 %v570, %v569
      %v590 = vpack.c.bf16 %v572, %v571
      %v591 = vpack.c.bf16 %v574, %v573
      %v592 = vpack.c.bf16 %v576, %v575
      %v593 = vld [vmem:[%s3] sm:$0xf]
      %v594 = vld [vmem:[%s3 + $0x4] sm:$0xf]
      %v595 = vld [vmem:[%s3 + $0x8] sm:$0xf]
      %v596 = vld [vmem:[%s3 + $0xc] sm:$0xf]
      %v597 = vld [vmem:[%s3 + $0x10] sm:$0xf]
      %v598 = vld [vmem:[%s3 + $0x14] sm:$0xf]
      %v599 = vld [vmem:[%s3 + $0x18] sm:$0xf]
      %v600 = vld [vmem:[%s3 + $0x1c] sm:$0xf]
      %v601 = vld [vmem:[%s4] sm:$0x1]
      %v603 = vperm.slane %v601, 0
      %v613 = vunpack.c.l.b16 %v593
      %v614 = vunpack.c.l.b16 %v594
      %v615 = vunpack.c.l.b16 %v595
      %v616 = vunpack.c.l.b16 %v596
      %v617 = vunpack.c.l.b16 %v597
      %v618 = vunpack.c.l.b16 %v598
      %v619 = vunpack.c.l.b16 %v599
      %v620 = vunpack.c.l.b16 %v600
      %v621 = vpack.c.b16 %v614, %v613
      %v622 = vpack.c.b16 %v616, %v615
      %v623 = vpack.c.b16 %v618, %v617
      %v624 = vpack.c.b16 %v620, %v619
      %vm629 = vcmask 523264
      %v631 = vsel %vm629, %v577, 0
      %v634 = vsel %vm629, %v578, 0
      %v637 = vsel %vm629, %v579, 0
      %v640 = vsel %vm629, %v580, 0
      %v643 = vsel %vm629, %v581, 0
      %v646 = vsel %vm629, %v582, 0
      %v649 = vsel %vm629, %v583, 0
      %v652 = vsel %vm629, %v584, 0
      %v655 = vsel %vm629, %v585, 0
      %v658 = vsel %vm629, %v586, 0
      %v661 = vsel %vm629, %v587, 0
      %v664 = vsel %vm629, %v588, 0
      %v667 = vsel %vm629, %v589, 0
      %v670 = vsel %vm629, %v590, 0
      %v673 = vsel %vm629, %v591, 0
      %v676 = vsel %vm629, %v592, 0
      %678 = vmatpush.bf16.msra.mxu0 0
      %679 = vmatpush.bf16.msra.mxu0 0
      %680 = vmatpush.bf16.msra.mxu0 0
      %681 = vmatpush.bf16.msra.mxu0 0
      %682 = vmatpush.bf16.msra.mxu0 %v624
      %683 = vmatpush.bf16.msra.mxu0 %v623
      %684 = vmatpush.bf16.msra.mxu0 %v622
      %685 = vmatpush.bf16.msra.mxu0 %v621
      %686 = vmatmul.bf16.gmra.mxu0 %v631
      %v687 = vpop.f32.mrf.mxu0
      %v688 = vadd.f32 %v603, %v687
      %v689 = vpop.f32.mrf.mxu0
      %v690 = vadd.f32 %v603, %v689
      %691 = vmatmul.bf16.gmra.mxu0 %v634
      %v692 = vpop.f32.mrf.mxu0
      %v693 = vadd.f32 %v603, %v692
      %v694 = vpop.f32.mrf.mxu0
      %v695 = vadd.f32 %v603, %v694
      %696 = vmatmul.bf16.gmra.mxu0 %v637
      %v697 = vpop.f32.mrf.mxu0
      %v698 = vadd.f32 %v603, %v697
      %v699 = vpop.f32.mrf.mxu0
      %v700 = vadd.f32 %v603, %v699
      %701 = vmatmul.bf16.gmra.mxu0 %v640
      %v702 = vpop.f32.mrf.mxu0
      %v703 = vadd.f32 %v603, %v702
      %v704 = vpop.f32.mrf.mxu0
      %v705 = vadd.f32 %v603, %v704
      %706 = vmatmul.bf16.gmra.mxu0 %v643
      %v707 = vpop.f32.mrf.mxu0
      %v708 = vadd.f32 %v603, %v707
      %v709 = vpop.f32.mrf.mxu0
      %v710 = vadd.f32 %v603, %v709
      %711 = vmatmul.bf16.gmra.mxu0 %v646
      %v712 = vpop.f32.mrf.mxu0
      %v713 = vadd.f32 %v603, %v712
      %v714 = vpop.f32.mrf.mxu0
      %v715 = vadd.f32 %v603, %v714
      %716 = vmatmul.bf16.gmra.mxu0 %v649
      %v717 = vpop.f32.mrf.mxu0
      %v718 = vadd.f32 %v603, %v717
      %v719 = vpop.f32.mrf.mxu0
      %v720 = vadd.f32 %v603, %v719
      %721 = vmatmul.bf16.gmra.mxu0 %v652
      %v722 = vpop.f32.mrf.mxu0
      %v723 = vadd.f32 %v603, %v722
      %v724 = vpop.f32.mrf.mxu0
      %v725 = vadd.f32 %v603, %v724
      %726 = vmatmul.bf16.gmra.mxu0 %v655
      %v727 = vpop.f32.mrf.mxu0
      %v728 = vadd.f32 %v603, %v727
      %v729 = vpop.f32.mrf.mxu0
      %v730 = vadd.f32 %v603, %v729
      %731 = vmatmul.bf16.gmra.mxu0 %v658
      %v732 = vpop.f32.mrf.mxu0
      %v733 = vadd.f32 %v603, %v732
      %v734 = vpop.f32.mrf.mxu0
      %v735 = vadd.f32 %v603, %v734
      %736 = vmatmul.bf16.gmra.mxu0 %v661
      %v737 = vpop.f32.mrf.mxu0
      %v738 = vadd.f32 %v603, %v737
      %v739 = vpop.f32.mrf.mxu0
      %v740 = vadd.f32 %v603, %v739
      %741 = vmatmul.bf16.gmra.mxu0 %v664
      %v742 = vpop.f32.mrf.mxu0
      %v743 = vadd.f32 %v603, %v742
      %v744 = vpop.f32.mrf.mxu0
      %v745 = vadd.f32 %v603, %v744
      %746 = vmatmul.bf16.gmra.mxu0 %v667
      %v747 = vpop.f32.mrf.mxu0
      %v748 = vadd.f32 %v603, %v747
      %v749 = vpop.f32.mrf.mxu0
      %v750 = vadd.f32 %v603, %v749
      %751 = vmatmul.bf16.gmra.mxu0 %v670
      %v752 = vpop.f32.mrf.mxu0
      %v753 = vadd.f32 %v603, %v752
      %v754 = vpop.f32.mrf.mxu0
      %v755 = vadd.f32 %v603, %v754
      %756 = vmatmul.bf16.gmra.mxu0 %v673
      %v757 = vpop.f32.mrf.mxu0
      %v758 = vadd.f32 %v603, %v757
      %v759 = vpop.f32.mrf.mxu0
      %v760 = vadd.f32 %v603, %v759
      %761 = vmatmul.bf16.gmra.mxu0 %v676
      %v762 = vpop.f32.mrf.mxu0
      %v763 = vadd.f32 %v603, %v762
      %v764 = vpop.f32.mrf.mxu0
      %v765 = vadd.f32 %v603, %v764
      %766 = vdwg.mxu0
      %v767 = vmax.f32 %v688, 0.0
      %v768 = vmax.f32 %v690, 0.0
      %v769 = vmax.f32 %v693, 0.0
      %v770 = vmax.f32 %v695, 0.0
      %v771 = vmax.f32 %v698, 0.0
      %v772 = vmax.f32 %v700, 0.0
      %v773 = vmax.f32 %v703, 0.0
      %v774 = vmax.f32 %v705, 0.0
      %v775 = vmax.f32 %v708, 0.0
      %v776 = vmax.f32 %v710, 0.0
      %v777 = vmax.f32 %v713, 0.0
      %v778 = vmax.f32 %v715, 0.0
      %v779 = vmax.f32 %v718, 0.0
      %v780 = vmax.f32 %v720, 0.0
      %v781 = vmax.f32 %v723, 0.0
      %v782 = vmax.f32 %v725, 0.0
      %v783 = vmax.f32 %v728, 0.0
      %v784 = vmax.f32 %v730, 0.0
      %v785 = vmax.f32 %v733, 0.0
      %v786 = vmax.f32 %v735, 0.0
      %v787 = vmax.f32 %v738, 0.0
      %v788 = vmax.f32 %v740, 0.0
      %v789 = vmax.f32 %v743, 0.0
      %v790 = vmax.f32 %v745, 0.0
      %v791 = vmax.f32 %v748, 0.0
      %v792 = vmax.f32 %v750, 0.0
      %v793 = vmax.f32 %v753, 0.0
      %v794 = vmax.f32 %v755, 0.0
      %v795 = vmax.f32 %v758, 0.0
      %v796 = vmax.f32 %v760, 0.0
      %v797 = vmax.f32 %v763, 0.0
      %v798 = vmax.f32 %v765, 0.0
      %v799 = vpack.c.bf16 %v768, %v767
      %v800 = vpack.c.bf16 %v770, %v769
      %v801 = vpack.c.bf16 %v772, %v771
      %v802 = vpack.c.bf16 %v774, %v773
      %v803 = vpack.c.bf16 %v776, %v775
      %v804 = vpack.c.bf16 %v778, %v777
      %v805 = vpack.c.bf16 %v780, %v779
      %v806 = vpack.c.bf16 %v782, %v781
      %v807 = vpack.c.bf16 %v784, %v783
      %v808 = vpack.c.bf16 %v786, %v785
      %v809 = vpack.c.bf16 %v788, %v787
      %v810 = vpack.c.bf16 %v790, %v789
      %v811 = vpack.c.bf16 %v792, %v791
      %v812 = vpack.c.bf16 %v794, %v793
      %v813 = vpack.c.bf16 %v796, %v795
      %v814 = vpack.c.bf16 %v798, %v797
      %v815 = vld [vmem:[%s5] sm:$0xf]
      %v816 = vld [vmem:[%s5 + $0x4] sm:$0xf]
      %v817 = vld [vmem:[%s5 + $0x8] sm:$0xf]
      %v818 = vld [vmem:[%s5 + $0xc] sm:$0xf]
      %v819 = vld [vmem:[%s5 + $0x10] sm:$0xf]
      %v820 = vld [vmem:[%s5 + $0x14] sm:$0xf]
      %v821 = vld [vmem:[%s5 + $0x18] sm:$0xf]
      %v822 = vld [vmem:[%s5 + $0x1c] sm:$0xf]
      %v823 = vld [vmem:[%s6] sm:$0x1]
      %v825 = vperm.slane %v823, 0
      %v835 = vunpack.c.l.b16 %v815
      %v836 = vunpack.c.l.b16 %v816
      %v837 = vunpack.c.l.b16 %v817
      %v838 = vunpack.c.l.b16 %v818
      %v839 = vunpack.c.l.b16 %v819
      %v840 = vunpack.c.l.b16 %v820
      %v841 = vunpack.c.l.b16 %v821
      %v842 = vunpack.c.l.b16 %v822
      %v843 = vpack.c.b16 %v836, %v835
      %v844 = vpack.c.b16 %v838, %v837
      %v845 = vpack.c.b16 %v840, %v839
      %v846 = vpack.c.b16 %v842, %v841
      %v852 = vsel %vm629, %v799, 0
      %v855 = vsel %vm629, %v800, 0
      %v858 = vsel %vm629, %v801, 0
      %v861 = vsel %vm629, %v802, 0
      %v864 = vsel %vm629, %v803, 0
      %v867 = vsel %vm629, %v804, 0
      %v870 = vsel %vm629, %v805, 0
      %v873 = vsel %vm629, %v806, 0
      %v876 = vsel %vm629, %v807, 0
      %v879 = vsel %vm629, %v808, 0
      %v882 = vsel %vm629, %v809, 0
      %v885 = vsel %vm629, %v810, 0
      %v888 = vsel %vm629, %v811, 0
      %v891 = vsel %vm629, %v812, 0
      %v894 = vsel %vm629, %v813, 0
      %v897 = vsel %vm629, %v814, 0
      %899 = vmatpush.bf16.msra.mxu0 0
      %900 = vmatpush.bf16.msra.mxu0 0
      %901 = vmatpush.bf16.msra.mxu0 0
      %902 = vmatpush.bf16.msra.mxu0 0
      %903 = vmatpush.bf16.msra.mxu0 %v846
      %904 = vmatpush.bf16.msra.mxu0 %v845
      %905 = vmatpush.bf16.msra.mxu0 %v844
      %906 = vmatpush.bf16.msra.mxu0 %v843
      %907 = vmatmul.bf16.gmra.mxu0 %v852
      %v908 = vpop.f32.mrf.mxu0
      %v909 = vadd.f32 %v825, %v908
      %v910 = vpop.f32.mrf.mxu0
      %v911 = vadd.f32 %v825, %v910
      %912 = vmatmul.bf16.gmra.mxu0 %v855
      %v913 = vpop.f32.mrf.mxu0
      %v914 = vadd.f32 %v825, %v913
      %v915 = vpop.f32.mrf.mxu0
      %v916 = vadd.f32 %v825, %v915
      %917 = vmatmul.bf16.gmra.mxu0 %v858
      %v918 = vpop.f32.mrf.mxu0
      %v919 = vadd.f32 %v825, %v918
      %v920 = vpop.f32.mrf.mxu0
      %v921 = vadd.f32 %v825, %v920
      %922 = vmatmul.bf16.gmra.mxu0 %v861
      %v923 = vpop.f32.mrf.mxu0
      %v924 = vadd.f32 %v825, %v923
      %v925 = vpop.f32.mrf.mxu0
      %v926 = vadd.f32 %v825, %v925
      %927 = vmatmul.bf16.gmra.mxu0 %v864
      %v928 = vpop.f32.mrf.mxu0
      %v929 = vadd.f32 %v825, %v928
      %v930 = vpop.f32.mrf.mxu0
      %v931 = vadd.f32 %v825, %v930
      %932 = vmatmul.bf16.gmra.mxu0 %v867
      %v933 = vpop.f32.mrf.mxu0
      %v934 = vadd.f32 %v825, %v933
      %v935 = vpop.f32.mrf.mxu0
      %v936 = vadd.f32 %v825, %v935
      %937 = vmatmul.bf16.gmra.mxu0 %v870
      %v938 = vpop.f32.mrf.mxu0
      %v939 = vadd.f32 %v825, %v938
      %v940 = vpop.f32.mrf.mxu0
      %v941 = vadd.f32 %v825, %v940
      %942 = vmatmul.bf16.gmra.mxu0 %v873
      %v943 = vpop.f32.mrf.mxu0
      %v944 = vadd.f32 %v825, %v943
      %v945 = vpop.f32.mrf.mxu0
      %v946 = vadd.f32 %v825, %v945
      %947 = vmatmul.bf16.gmra.mxu0 %v876
      %v948 = vpop.f32.mrf.mxu0
      %v949 = vadd.f32 %v825, %v948
      %v950 = vpop.f32.mrf.mxu0
      %v951 = vadd.f32 %v825, %v950
      %952 = vmatmul.bf16.gmra.mxu0 %v879
      %v953 = vpop.f32.mrf.mxu0
      %v954 = vadd.f32 %v825, %v953
      %v955 = vpop.f32.mrf.mxu0
      %v956 = vadd.f32 %v825, %v955
      %957 = vmatmul.bf16.gmra.mxu0 %v882
      %v958 = vpop.f32.mrf.mxu0
      %v959 = vadd.f32 %v825, %v958
      %v960 = vpop.f32.mrf.mxu0
      %v961 = vadd.f32 %v825, %v960
      %962 = vmatmul.bf16.gmra.mxu0 %v885
      %v963 = vpop.f32.mrf.mxu0
      %v964 = vadd.f32 %v825, %v963
      %v965 = vpop.f32.mrf.mxu0
      %v966 = vadd.f32 %v825, %v965
      %967 = vmatmul.bf16.gmra.mxu0 %v888
      %v968 = vpop.f32.mrf.mxu0
      %v969 = vadd.f32 %v825, %v968
      %v970 = vpop.f32.mrf.mxu0
      %v971 = vadd.f32 %v825, %v970
      %972 = vmatmul.bf16.gmra.mxu0 %v891
      %v973 = vpop.f32.mrf.mxu0
      %v974 = vadd.f32 %v825, %v973
      %v975 = vpop.f32.mrf.mxu0
      %v976 = vadd.f32 %v825, %v975
      %977 = vmatmul.bf16.gmra.mxu0 %v894
      %v978 = vpop.f32.mrf.mxu0
      %v979 = vadd.f32 %v825, %v978
      %v980 = vpop.f32.mrf.mxu0
      %v981 = vadd.f32 %v825, %v980
      %982 = vmatmul.bf16.gmra.mxu0 %v897
      %v983 = vpop.f32.mrf.mxu0
      %v984 = vadd.f32 %v825, %v983
      %v985 = vpop.f32.mrf.mxu0
      %v986 = vadd.f32 %v825, %v985
      %987 = vdwg.mxu0
      %vm988 = vcmask 31744
      %989 = vst.msk [vmem:[%s280] sm:$0xff] %vm988, %v909
      %990 = vst.msk [vmem:[%s280 + $0x8] sm:$0xff] %vm988, %v911
      %991 = vst.msk [vmem:[%s280 + $0x10] sm:$0xff] %vm988, %v914
      %992 = vst.msk [vmem:[%s280 + $0x18] sm:$0xff] %vm988, %v916
      %993 = vst.msk [vmem:[%s280 + $0x20] sm:$0xff] %vm988, %v919
      %994 = vst.msk [vmem:[%s280 + $0x28] sm:$0xff] %vm988, %v921
      %995 = vst.msk [vmem:[%s280 + $0x30] sm:$0xff] %vm988, %v924
      %996 = vst.msk [vmem:[%s280 + $0x38] sm:$0xff] %vm988, %v926
      %997 = vst.msk [vmem:[%s280 + $0x40] sm:$0xff] %vm988, %v929
      %998 = vst.msk [vmem:[%s280 + $0x48] sm:$0xff] %vm988, %v931
      %999 = vst.msk [vmem:[%s280 + $0x50] sm:$0xff] %vm988, %v934
      %1000 = vst.msk [vmem:[%s280 + $0x58] sm:$0xff] %vm988, %v936
      %1001 = vst.msk [vmem:[%s280 + $0x60] sm:$0xff] %vm988, %v939
      %1002 = vst.msk [vmem:[%s280 + $0x68] sm:$0xff] %vm988, %v941
      %1003 = vst.msk [vmem:[%s280 + $0x70] sm:$0xff] %vm988, %v944
      %1004 = vst.msk [vmem:[%s280 + $0x78] sm:$0xff] %vm988, %v946
      %1005 = vst.msk [vmem:[%s280 + $0x80] sm:$0xff] %vm988, %v949
      %1006 = vst.msk [vmem:[%s280 + $0x88] sm:$0xff] %vm988, %v951
      %1007 = vst.msk [vmem:[%s280 + $0x90] sm:$0xff] %vm988, %v954
      %1008 = vst.msk [vmem:[%s280 + $0x98] sm:$0xff] %vm988, %v956
      %1009 = vst.msk [vmem:[%s280 + $0xa0] sm:$0xff] %vm988, %v959
      %1010 = vst.msk [vmem:[%s280 + $0xa8] sm:$0xff] %vm988, %v961
      %1011 = vst.msk [vmem:[%s280 + $0xb0] sm:$0xff] %vm988, %v964
      %1012 = vst.msk [vmem:[%s280 + $0xb8] sm:$0xff] %vm988, %v966
      %1013 = vst.msk [vmem:[%s280 + $0xc0] sm:$0xff] %vm988, %v969
      %1014 = vst.msk [vmem:[%s280 + $0xc8] sm:$0xff] %vm988, %v971
      %1015 = vst.msk [vmem:[%s280 + $0xd0] sm:$0xff] %vm988, %v974
      %1016 = vst.msk [vmem:[%s280 + $0xd8] sm:$0xff] %vm988, %v976
      %1017 = vst.msk [vmem:[%s280 + $0xe0] sm:$0xff] %vm988, %v979
      %1018 = vst.msk [vmem:[%s280 + $0xe8] sm:$0xff] %vm988, %v981
      %1019 = vst.msk [vmem:[%s280 + $0xf0] sm:$0xff] %vm988, %v984
      %1020 = vst.msk [vmem:[%s280 + $0xf8] sm:$0xff] %vm988, %v986
      %s1021 = smul.u32 32, %s18
      %p1022 = scmp.lt.s32.totalorder %s1021, 63
      %s1023 = scalar_select %p1022, %s1021, 63
      %s1024 = smul.addr %s1023, 8
      %s1025 = scalar_lea.vmem %s7, %s1024
      // Predicated region
      $region49: #{tpu_custom_call.1} parent=47 // pred_check
        %p1026 = pneg %p188
      $region50: #{tpu_custom_call.1} parent=47 // pred_check_branch
        %1028 = sbr.rel (%p1026) target = $region52
      $region51: #{tpu_custom_call.1} parent=47 // pred_region
        %s1029 = smul.u32 32, %s18
      $region52: #{tpu_custom_call.1} parent=47 // pred_fallthru
        _
    $region48: #{tpu_custom_call.1} parent=5 // pred_fallthru
      _
    %p1030 = scmp.le.s32.totalorder 2, %s13
    // Predicated region
    $region53: #{tpu_custom_call.1} parent=5 // pred_check
      %p1031 = pneg %p1030
    $region54: #{tpu_custom_call.1} parent=5 // pred_check_branch
      %1033 = sbr.rel (%p1031) target = $region56
    $region55: #{tpu_custom_call.1} parent=5 // pred_region
      %s1034 = ssub.s32 %s13, 2
      // Predicated region
      $region57: #{tpu_custom_call.1} parent=55 // pred_check
        %p1035 = pneg %p194
      $region58: #{tpu_custom_call.1} parent=55 // pred_check_branch
        %1037 = sbr.rel (%p1035) target = $region60
      $region59: #{tpu_custom_call.1} parent=55 // pred_region
        %s1038 = smul.u32 32, %s19
        %p1039 = scmp.lt.s32.totalorder %s1038, 63
        %s1040 = scalar_select %p1039, %s1038, 63
        %s1041 = smul.addr %s1040, 8
        %s1042 = scalar_lea.vmem %s7, %s1041
      $region60: #{tpu_custom_call.1} parent=55 // pred_fallthru
        _
    $region56: #{tpu_custom_call.1} parent=5 // pred_fallthru
      _
  $region6: #{tpu_custom_call.1} parent=0 // loop_footer
    %s17 = sadd.s32 1, %s13
  $region7: #{tpu_custom_call.1} parent=0 // loop_footer_branch
    %12 = sbr.rel target = $region3
  $region8: #{tpu_custom_call.1} parent=0 // loop_exit
    _

</llo_original>
